<compile_context>
chip_gen: v5e
topology: v5e:2x2
jax: 0.10.0
libtpu: 0.0.40
codegen_flags: <defaults>
</compile_context>

<pallas_src>
import functools

import jax
import jax.numpy as jnp
from jax.experimental import pallas as pl
from jax.experimental.pallas import tpu as pltpu


def _dice_partial_kernel(x_ref, t_ref, inter_ref, zsum_ref, ysum_ref, bce_ref,
                         *, hw, tiles_per_split, use_bce, use_softmax):
    # x_ref:     (C, TILE_HW) f32 logits block
    # t_ref:     (1, TILE_HW) i32 labels block
    # inter_ref / zsum_ref / ysum_ref: (C, 1) f32 per-split accumulators
    # bce_ref:   (1, 1) f32 per-split BCE-sum accumulator
    n_id = pl.program_id(1)
    p_id = pl.program_id(2)

    # Zero this split's accumulators on its first (batch, pixel-tile) step.
    @pl.when((n_id == 0) & (p_id == 0))
    def _init():
        inter_ref[...] = jnp.zeros_like(inter_ref)
        zsum_ref[...] = jnp.zeros_like(zsum_ref)
        ysum_ref[...] = jnp.zeros_like(ysum_ref)
        bce_ref[...] = jnp.zeros_like(bce_ref)

    x = x_ref[...]                                    # (C, TILE_HW) f32
    labels = t_ref[...].astype(jnp.int32)             # (1, TILE_HW)
    num_cls, tile_hw = x.shape

    # Valid-lane mask: global pixel index inside the H*W plane.  This also
    # zeroes the whole (clamped) tail tile when the tile count is odd.
    tile_idx = pl.program_id(0) * tiles_per_split + p_id
    lane = jax.lax.broadcasted_iota(jnp.int32, (1, tile_hw), 1)
    valid = (tile_idx * tile_hw + lane) < hw           # (1, TILE_HW) bool

    cls_ids = jax.lax.broadcasted_iota(jnp.int32, (num_cls, tile_hw), 0)
    onehot = jnp.where(valid, (cls_ids == labels).astype(jnp.float32), 0.0)

    if use_bce:
        # Stable binary_cross_entropy_with_logits, summed over valid elements
        # (mean taken in the JAX epilogue).
        bce_el = jnp.maximum(x, 0.0) - x * onehot + jnp.log1p(jnp.exp(-jnp.abs(x)))
        bce_ref[...] += jnp.sum(jnp.where(valid, bce_el, 0.0), keepdims=True)

    score = x
    if use_softmax:
        m = jnp.max(x, axis=0, keepdims=True)
        e = jnp.exp(x - m)
        denom = jnp.sum(e, axis=0, keepdims=True)
        # EUP approximate reciprocal on the small (1, TILE_HW) denominator row.
        score = e * pl.reciprocal(denom, approx=True)

    inter_ref[...] += jnp.sum(jnp.where(valid, score * onehot, 0.0),
                              axis=1, keepdims=True)
    zsum_ref[...] += jnp.sum(jnp.where(valid, score * score, 0.0),
                             axis=1, keepdims=True)
    ysum_ref[...] += jnp.sum(onehot, axis=1, keepdims=True)


def dice_loss(inputs, target, *, num_classes, bce_loss=False, weight=None,
              softmax=False, tile_hw=8192):
    """Pallas implementation of DiceLoss.forward.

    inputs: (N, C, H, W) float logits (or dict with key 'out')
    target: (N, H, W) integer class labels in [0, num_classes)
    """
    if isinstance(inputs, dict) and "out" in inputs:
        inputs = inputs["out"]

    N, C, H, W = inputs.shape
    assert C == num_classes
    HW = H * W

    # Free reshapes only -- no host-side transpose (saves a full HBM pass).
    x = inputs.reshape(N, C, HW)
    if x.dtype != jnp.float32:
        x = x.astype(jnp.float32)
    t = target.reshape(N, 1, HW)
    if t.dtype != jnp.int32:
        # TODO(synk): pass int8 labels straight through (in-kernel widen) to
        # shave ~15% HBM traffic when the caller already stores them narrow.
        t = t.astype(jnp.int32)

    assert tile_hw % 128 == 0
    tile = min(tile_hw, ((HW + 127) // 128) * 128)     # lane-tile, mult of 128
    num_tiles = pl.cdiv(HW, tile)
    n_split = 2 if num_tiles >= 2 else 1               # both TCs on v7x
    tiles_per_split = pl.cdiv(num_tiles, n_split)

    def _pix_map(c, n, p):
        # Clamp so the (possibly duplicated) tail tile never DMAs out of
        # range; the kernel's lane mask zeroes its contribution.
        return (n, 0, jnp.minimum(c * tiles_per_split + p, num_tiles - 1))

    def _acc_map(c, n, p):
        return (c, 0, 0)

    kernel = functools.partial(
        _dice_partial_kernel,
        hw=HW, tiles_per_split=tiles_per_split,
        use_bce=bce_loss, use_softmax=softmax)

    out_shape = (
        jax.ShapeDtypeStruct((n_split, C, 1), jnp.float32),   # intersect
        jax.ShapeDtypeStruct((n_split, C, 1), jnp.float32),   # sum(score^2)
        jax.ShapeDtypeStruct((n_split, C, 1), jnp.float32),   # sum(target)
        jax.ShapeDtypeStruct((n_split, 1, 1), jnp.float32),   # bce sum
    )
    inter, zsum, ysum, bce_sum = pl.pallas_call(
        kernel,
        out_shape=out_shape,
        grid=(n_split, N, tiles_per_split),
        in_specs=[
            pl.BlockSpec((None, C, tile), _pix_map),          # logits (C, tile)
            pl.BlockSpec((None, 1, tile), _pix_map),          # labels (1, tile)
        ],
        out_specs=(
            pl.BlockSpec((None, C, 1), _acc_map),
            pl.BlockSpec((None, C, 1), _acc_map),
            pl.BlockSpec((None, C, 1), _acc_map),
            pl.BlockSpec((None, 1, 1), _acc_map),
        ),
        compiler_params=pltpu.CompilerParams(
            dimension_semantics=("parallel", "arbitrary", "arbitrary")),
    )(x, t)

    # Tiny final combine (a few * C floats) in plain JAX.
    inter = jnp.sum(inter, axis=0)[:, 0]     # (C,)
    zsum = jnp.sum(zsum, axis=0)[:, 0]
    ysum = jnp.sum(ysum, axis=0)[:, 0]

    if weight is None:
        weight = [1.0] * num_classes
    w = jnp.asarray(weight, dtype=jnp.float32)

    smooth = 1e-05
    dice = 1.0 - (2.0 * inter + smooth) / (zsum + ysum + smooth)
    loss = jnp.sum(dice * w) / num_classes
    if bce_loss:
        loss = loss + 0.5 * (jnp.sum(bce_sum) / (N * C * HW))
    return loss


def _dice_loss_ref(inputs, target, *, num_classes, bce_loss=False,
                   weight=None, softmax=False):
    """Pure-JAX reference mirroring the PyTorch module."""
    onehot = jnp.stack(
        [(target == i).astype(jnp.float32) for i in range(num_classes)], axis=1)
    x = inputs.astype(jnp.float32)
    bce = jnp.mean(jnp.maximum(x, 0.0) - x * onehot + jnp.log1p(jnp.exp(-jnp.abs(x))))
    score = jax.nn.softmax(x, axis=1) if softmax else x
    if weight is None:
        weight = [1.0] * num_classes
    smooth = 1e-05
    loss = 0.0
    for i in range(num_classes):
        s = score[:, i]
        tt = onehot[:, i]
        intersect = jnp.sum(s * tt)
        y_sum = jnp.sum(tt * tt)
        z_sum = jnp.sum(s * s)
        d = 1.0 - (2.0 * intersect + smooth) / (z_sum + y_sum + smooth)
        loss = loss + d * weight[i]
    loss = loss / num_classes
    if bce_loss:
        loss = loss + 0.5 * bce
    return loss


if __name__ == "__main__":
    key = jax.random.PRNGKey(0)
    k1, k2, k3, k4 = jax.random.split(key, 4)

    num_classes = 4
    N, H, W = 2, 16, 16
    logits = jax.random.normal(k1, (N, num_classes, H, W), dtype=jnp.float32)
    labels = jax.random.randint(k2, (N, H, W), 0, num_classes, dtype=jnp.int32)

    # Config 1: module(bce_loss=True), forward(softmax=True), default weights.
    out = jax.block_until_ready(
        dice_loss(logits, labels, num_classes=num_classes,
                  bce_loss=True, softmax=True))
    ref = _dice_loss_ref(logits, labels, num_classes=num_classes,
                         bce_loss=True, softmax=True)
    # Relaxed tolerance: softmax path uses the EUP approximate reciprocal.
    assert jnp.allclose(out, ref, rtol=1e-3, atol=1e-4), (out, ref)

    # Config 2: no softmax / no bce, explicit class weights (exact path).
    wts = [0.5, 1.0, 1.5, 2.0]
    out2 = jax.block_until_ready(
        dice_loss(logits, labels, num_classes=num_classes,
                  bce_loss=False, softmax=False, weight=wts))
    ref2 = _dice_loss_ref(logits, labels, num_classes=num_classes,
                          bce_loss=False, softmax=False, weight=wts)
    assert jnp.allclose(out2, ref2, rtol=1e-5, atol=1e-6), (out2, ref2)

    # Config 3: multi-tile streaming path with a ragged last tile and an odd
    # tile count (exercises lane masking, the clamped tail tile and the 2-way
    # core split).  H*W = 2209 = 8*256 + 161 with a 256-wide pixel tile.
    H3 = W3 = 47
    logits3 = jax.random.normal(k3, (N, num_classes, H3, W3), dtype=jnp.float32)
    labels3 = jax.random.randint(k4, (N, H3, W3), 0, num_classes, dtype=jnp.int32)
    out3 = jax.block_until_ready(
        dice_loss(logits3, labels3, num_classes=num_classes,
                  bce_loss=True, softmax=True, tile_hw=256))
    ref3 = _dice_loss_ref(logits3, labels3, num_classes=num_classes,
                          bce_loss=True, softmax=True)
    assert jnp.allclose(out3, ref3, rtol=1e-3, atol=1e-4), (out3, ref3)

    print("KERNEL_OK")
</pallas_src>

<mosaic_0001>
module attributes {stable_mosaic.version = 11 : i64} {
  func.func @_dice_partial_kernel(%arg0: i32, %arg1: i32, %arg2: i32, %arg3: memref<1x4x256xf32, #tpu.memory_space<vmem>>, %arg4: memref<1x1x256xi32, #tpu.memory_space<vmem>>, %arg5: memref<1x4x1xf32, #tpu.memory_space<vmem>>, %arg6: memref<1x4x1xf32, #tpu.memory_space<vmem>>, %arg7: memref<1x4x1xf32, #tpu.memory_space<vmem>>, %arg8: memref<1x1x1xf32, #tpu.memory_space<vmem>>) attributes {dimension_semantics = [#tpu.dimension_semantics<parallel>, #tpu.dimension_semantics<arbitrary>, #tpu.dimension_semantics<arbitrary>], iteration_bounds = array<i64: 1, 2, 1>, scalar_prefetch = 0 : i64, scratch_operands = 0 : i64, tpu.core_type = #tpu.core_type<tc>, window_params = [{transform_indices = @transform_0, window_bounds = array<i64: 1, 4, 256>}, {transform_indices = @transform_1, window_bounds = array<i64: 1, 1, 256>}, {transform_indices = @transform_2, window_bounds = array<i64: 1, 4, 1>}, {transform_indices = @transform_3, window_bounds = array<i64: 1, 4, 1>}, {transform_indices = @transform_4, window_bounds = array<i64: 1, 4, 1>}, {transform_indices = @transform_5, window_bounds = array<i64: 1, 1, 1>}]} {
    %c0_i32 = arith.constant 0 : i32
    %0 = arith.cmpi eq, %arg1, %c0_i32 : i32
    %c0_i32_0 = arith.constant 0 : i32
    %1 = arith.cmpi eq, %arg2, %c0_i32_0 : i32
    %2 = arith.andi %0, %1 : i1
    %3 = arith.extui %2 : i1 to i32
    %c0_i32_1 = arith.constant 0 : i32
    %4 = arith.cmpi ne, %3, %c0_i32_1 : i32
    scf.if %4 {
      %cst_43 = arith.constant 0.000000e+00 : f32
      %95 = vector.broadcast %cst_43 : f32 to vector<4x1xf32>
      %c0_44 = arith.constant 0 : index
      %c0_45 = arith.constant 0 : index
      %c0_46 = arith.constant 0 : index
      %96 = vector.load %arg5[%c0_44, %c0_45, %c0_46] : memref<1x4x1xf32, #tpu.memory_space<vmem>>, vector<1x4x1xf32>
      %97 = vector.shape_cast %96 : vector<1x4x1xf32> to vector<4x1xf32>
      %98 = vector.shape_cast %95 : vector<4x1xf32> to vector<1x4x1xf32>
      tpu.vector_store %arg5[%c0_44, %c0_45, %c0_46], %98 {strides = array<i32>} : memref<1x4x1xf32, #tpu.memory_space<vmem>>, vector<1x4x1xf32>,
      %cst_47 = arith.constant 0.000000e+00 : f32
      %99 = vector.broadcast %cst_47 : f32 to vector<4x1xf32>
      %c0_48 = arith.constant 0 : index
      %c0_49 = arith.constant 0 : index
      %c0_50 = arith.constant 0 : index
      %100 = vector.load %arg6[%c0_48, %c0_49, %c0_50] : memref<1x4x1xf32, #tpu.memory_space<vmem>>, vector<1x4x1xf32>
      %101 = vector.shape_cast %100 : vector<1x4x1xf32> to vector<4x1xf32>
      %102 = vector.shape_cast %99 : vector<4x1xf32> to vector<1x4x1xf32>
      tpu.vector_store %arg6[%c0_48, %c0_49, %c0_50], %102 {strides = array<i32>} : memref<1x4x1xf32, #tpu.memory_space<vmem>>, vector<1x4x1xf32>,
      %cst_51 = arith.constant 0.000000e+00 : f32
      %103 = vector.broadcast %cst_51 : f32 to vector<4x1xf32>
      %c0_52 = arith.constant 0 : index
      %c0_53 = arith.constant 0 : index
      %c0_54 = arith.constant 0 : index
      %104 = vector.load %arg7[%c0_52, %c0_53, %c0_54] : memref<1x4x1xf32, #tpu.memory_space<vmem>>, vector<1x4x1xf32>
      %105 = vector.shape_cast %104 : vector<1x4x1xf32> to vector<4x1xf32>
      %106 = vector.shape_cast %103 : vector<4x1xf32> to vector<1x4x1xf32>
      tpu.vector_store %arg7[%c0_52, %c0_53, %c0_54], %106 {strides = array<i32>} : memref<1x4x1xf32, #tpu.memory_space<vmem>>, vector<1x4x1xf32>,
      %cst_55 = arith.constant 0.000000e+00 : f32
      %107 = vector.broadcast %cst_55 : f32 to vector<1x1xf32>
      %c0_56 = arith.constant 0 : index
      %c0_57 = arith.constant 0 : index
      %c0_58 = arith.constant 0 : index
      %108 = vector.load %arg8[%c0_56, %c0_57, %c0_58] : memref<1x1x1xf32, #tpu.memory_space<vmem>>, vector<1x1x1xf32>
      %109 = vector.shape_cast %108 : vector<1x1x1xf32> to vector<1x1xf32>
      %110 = vector.shape_cast %107 : vector<1x1xf32> to vector<1x1x1xf32>
      tpu.vector_store %arg8[%c0_56, %c0_57, %c0_58], %110 {strides = array<i32>} : memref<1x1x1xf32, #tpu.memory_space<vmem>>, vector<1x1x1xf32>,
    } else {
    }
    %c0 = arith.constant 0 : index
    %c0_2 = arith.constant 0 : index
    %c0_3 = arith.constant 0 : index
    %5 = vector.load %arg3[%c0, %c0_2, %c0_3] : memref<1x4x256xf32, #tpu.memory_space<vmem>>, vector<1x4x256xf32>
    %6 = vector.shape_cast %5 : vector<1x4x256xf32> to vector<4x256xf32>
    %c0_4 = arith.constant 0 : index
    %c0_5 = arith.constant 0 : index
    %c0_6 = arith.constant 0 : index
    %7 = vector.load %arg4[%c0_4, %c0_5, %c0_6] : memref<1x1x256xi32, #tpu.memory_space<vmem>>, vector<1x1x256xi32>
    %8 = vector.shape_cast %7 : vector<1x1x256xi32> to vector<1x256xi32>
    %c1_i32 = arith.constant 1 : i32
    %9 = arith.muli %arg0, %c1_i32 : i32
    %10 = arith.addi %9, %arg2 : i32
    %11 = tpu.iota {dimensions = array<i32: 1>} : vector<1x256xi32>
    %c256_i32 = arith.constant 256 : i32
    %12 = arith.muli %10, %c256_i32 : i32
    %13 = vector.broadcast %12 : i32 to vector<1x256xi32>
    %14 = arith.addi %13, %11 : vector<1x256xi32>
    %c256_i32_7 = arith.constant 256 : i32
    %15 = vector.broadcast %c256_i32_7 : i32 to vector<1x256xi32>
    %16 = arith.cmpi slt, %14, %15 : vector<1x256xi32>
    %17 = tpu.iota {dimensions = array<i32: 0>} : vector<4x256xi32>
    %18 = vector.broadcast %8 : vector<1x256xi32> to vector<4x256xi32>
    %19 = arith.cmpi eq, %17, %18 : vector<4x256xi32>
    %20 = arith.extui %19 : vector<4x256xi1> to vector<4x256xi32>
    %21 = arith.sitofp %20 : vector<4x256xi32> to vector<4x256xf32>
    %cst = arith.constant 0.000000e+00 : f32
    %22 = vector.shape_cast %16 : vector<1x256xi1> to vector<1x256xi1>
    %23 = vector.broadcast %22 : vector<1x256xi1> to vector<4x256xi1>
    %24 = vector.broadcast %cst : f32 to vector<4x256xf32>
    %25 = arith.select %23, %21, %24 : vector<4x256xi1>, vector<4x256xf32>
    %cst_8 = arith.constant 0.000000e+00 : f32
    %26 = vector.broadcast %cst_8 : f32 to vector<4x256xf32>
    %27 = arith.maximumf %6, %26 : vector<4x256xf32>
    %28 = arith.mulf %6, %25 : vector<4x256xf32>
    %29 = arith.subf %27, %28 : vector<4x256xf32>
    %30 = math.absf %6 : vector<4x256xf32>
    %cst_9 = arith.constant 0.000000e+00 : f32
    %31 = vector.broadcast %cst_9 : f32 to vector<4x256xf32>
    %32 = arith.subf %31, %30 : vector<4x256xf32>
    %33 = math.exp %32 : vector<4x256xf32>
    %34 = math.log1p %33 : vector<4x256xf32>
    %35 = arith.addf %29, %34 : vector<4x256xf32>
    %c0_10 = arith.constant 0 : index
    %c0_11 = arith.constant 0 : index
    %c0_12 = arith.constant 0 : index
    %36 = vector.load %arg8[%c0_10, %c0_11, %c0_12] : memref<1x1x1xf32, #tpu.memory_space<vmem>>, vector<1x1x1xf32>
    %37 = vector.shape_cast %36 : vector<1x1x1xf32> to vector<1x1xf32>
    %cst_13 = arith.constant 0.000000e+00 : f32
    %38 = vector.shape_cast %16 : vector<1x256xi1> to vector<1x256xi1>
    %39 = vector.broadcast %38 : vector<1x256xi1> to vector<4x256xi1>
    %40 = vector.broadcast %cst_13 : f32 to vector<4x256xf32>
    %41 = arith.select %39, %35, %40 : vector<4x256xi1>, vector<4x256xf32>
    %42 = vector.shape_cast %41 : vector<4x256xf32> to vector<1x4x256xf32>
    %cst_14 = arith.constant dense<0.000000e+00> : vector<1xf32>
    %43 = vector.multi_reduction <add>, %42, %cst_14 [1, 2] : vector<1x4x256xf32> to vector<1xf32>
    %44 = vector.shape_cast %43 : vector<1xf32> to vector<1x1x1xf32>
    %45 = vector.extract %44[0, 0, 0] : f32 from vector<1x1x1xf32>
    %46 = vector.broadcast %45 : f32 to vector<1x1xf32>
    %47 = arith.addf %37, %46 : vector<1x1xf32>
    %c0_15 = arith.constant 0 : index
    %c0_16 = arith.constant 0 : index
    %c0_17 = arith.constant 0 : index
    %48 = vector.load %arg8[%c0_15, %c0_16, %c0_17] : memref<1x1x1xf32, #tpu.memory_space<vmem>>, vector<1x1x1xf32>
    %49 = vector.shape_cast %48 : vector<1x1x1xf32> to vector<1x1xf32>
    %50 = vector.shape_cast %47 : vector<1x1xf32> to vector<1x1x1xf32>
    tpu.vector_store %arg8[%c0_15, %c0_16, %c0_17], %50 {strides = array<i32>} : memref<1x1x1xf32, #tpu.memory_space<vmem>>, vector<1x1x1xf32>,
    %cst_18 = arith.constant dense<0xFF800000> : vector<256xf32>
    %51 = vector.multi_reduction <maximumf>, %6, %cst_18 [0] : vector<4x256xf32> to vector<256xf32>
    %52 = vector.shape_cast %51 : vector<256xf32> to vector<1x256xf32>
    %53 = vector.broadcast %52 : vector<1x256xf32> to vector<4x256xf32>
    %54 = arith.subf %6, %53 : vector<4x256xf32>
    %55 = math.exp %54 : vector<4x256xf32>
    %cst_19 = arith.constant dense<0.000000e+00> : vector<256xf32>
    %56 = vector.multi_reduction <add>, %55, %cst_19 [0] : vector<4x256xf32> to vector<256xf32>
    %57 = vector.shape_cast %56 : vector<256xf32> to vector<1x256xf32>
    %58 = tpu.reciprocal %57 {approx = true} : vector<1x256xf32> -> vector<1x256xf32>
    %59 = vector.broadcast %58 : vector<1x256xf32> to vector<4x256xf32>
    %60 = arith.mulf %55, %59 : vector<4x256xf32>
    %c0_20 = arith.constant 0 : index
    %c0_21 = arith.constant 0 : index
    %c0_22 = arith.constant 0 : index
    %61 = vector.load %arg5[%c0_20, %c0_21, %c0_22] : memref<1x4x1xf32, #tpu.memory_space<vmem>>, vector<1x4x1xf32>
    %62 = vector.shape_cast %61 : vector<1x4x1xf32> to vector<4x1xf32>
    %63 = arith.mulf %60, %25 : vector<4x256xf32>
    %cst_23 = arith.constant 0.000000e+00 : f32
    %64 = vector.shape_cast %16 : vector<1x256xi1> to vector<1x256xi1>
    %65 = vector.broadcast %64 : vector<1x256xi1> to vector<4x256xi1>
    %66 = vector.broadcast %cst_23 : f32 to vector<4x256xf32>
    %67 = arith.select %65, %63, %66 : vector<4x256xi1>, vector<4x256xf32>
    %cst_24 = arith.constant dense<0.000000e+00> : vector<4xf32>
    %68 = vector.multi_reduction <add>, %67, %cst_24 [1] : vector<4x256xf32> to vector<4xf32>
    %69 = vector.shape_cast %68 : vector<4xf32> to vector<4x1xf32>
    %70 = arith.addf %62, %69 : vector<4x1xf32>
    %c0_25 = arith.constant 0 : index
    %c0_26 = arith.constant 0 : index
    %c0_27 = arith.constant 0 : index
    %71 = vector.load %arg5[%c0_25, %c0_26, %c0_27] : memref<1x4x1xf32, #tpu.memory_space<vmem>>, vector<1x4x1xf32>
    %72 = vector.shape_cast %71 : vector<1x4x1xf32> to vector<4x1xf32>
    %73 = vector.shape_cast %70 : vector<4x1xf32> to vector<1x4x1xf32>
    tpu.vector_store %arg5[%c0_25, %c0_26, %c0_27], %73 {strides = array<i32>} : memref<1x4x1xf32, #tpu.memory_space<vmem>>, vector<1x4x1xf32>,
    %c0_28 = arith.constant 0 : index
    %c0_29 = arith.constant 0 : index
    %c0_30 = arith.constant 0 : index
    %74 = vector.load %arg6[%c0_28, %c0_29, %c0_30] : memref<1x4x1xf32, #tpu.memory_space<vmem>>, vector<1x4x1xf32>
    %75 = vector.shape_cast %74 : vector<1x4x1xf32> to vector<4x1xf32>
    %76 = arith.mulf %60, %60 : vector<4x256xf32>
    %cst_31 = arith.constant 0.000000e+00 : f32
    %77 = vector.shape_cast %16 : vector<1x256xi1> to vector<1x256xi1>
    %78 = vector.broadcast %77 : vector<1x256xi1> to vector<4x256xi1>
    %79 = vector.broadcast %cst_31 : f32 to vector<4x256xf32>
    %80 = arith.select %78, %76, %79 : vector<4x256xi1>, vector<4x256xf32>
    %cst_32 = arith.constant dense<0.000000e+00> : vector<4xf32>
    %81 = vector.multi_reduction <add>, %80, %cst_32 [1] : vector<4x256xf32> to vector<4xf32>
    %82 = vector.shape_cast %81 : vector<4xf32> to vector<4x1xf32>
    %83 = arith.addf %75, %82 : vector<4x1xf32>
    %c0_33 = arith.constant 0 : index
    %c0_34 = arith.constant 0 : index
    %c0_35 = arith.constant 0 : index
    %84 = vector.load %arg6[%c0_33, %c0_34, %c0_35] : memref<1x4x1xf32, #tpu.memory_space<vmem>>, vector<1x4x1xf32>
    %85 = vector.shape_cast %84 : vector<1x4x1xf32> to vector<4x1xf32>
    %86 = vector.shape_cast %83 : vector<4x1xf32> to vector<1x4x1xf32>
    tpu.vector_store %arg6[%c0_33, %c0_34, %c0_35], %86 {strides = array<i32>} : memref<1x4x1xf32, #tpu.memory_space<vmem>>, vector<1x4x1xf32>,
    %c0_36 = arith.constant 0 : index
    %c0_37 = arith.constant 0 : index
    %c0_38 = arith.constant 0 : index
    %87 = vector.load %arg7[%c0_36, %c0_37, %c0_38] : memref<1x4x1xf32, #tpu.memory_space<vmem>>, vector<1x4x1xf32>
    %88 = vector.shape_cast %87 : vector<1x4x1xf32> to vector<4x1xf32>
    %cst_39 = arith.constant dense<0.000000e+00> : vector<4xf32>
    %89 = vector.multi_reduction <add>, %25, %cst_39 [1] : vector<4x256xf32> to vector<4xf32>
    %90 = vector.shape_cast %89 : vector<4xf32> to vector<4x1xf32>
    %91 = arith.addf %88, %90 : vector<4x1xf32>
    %c0_40 = arith.constant 0 : index
    %c0_41 = arith.constant 0 : index
    %c0_42 = arith.constant 0 : index
    %92 = vector.load %arg7[%c0_40, %c0_41, %c0_42] : memref<1x4x1xf32, #tpu.memory_space<vmem>>, vector<1x4x1xf32>
    %93 = vector.shape_cast %92 : vector<1x4x1xf32> to vector<4x1xf32>
    %94 = vector.shape_cast %91 : vector<4x1xf32> to vector<1x4x1xf32>
    tpu.vector_store %arg7[%c0_40, %c0_41, %c0_42], %94 {strides = array<i32>} : memref<1x4x1xf32, #tpu.memory_space<vmem>>, vector<1x4x1xf32>,
    return
  }
  func.func @transform_0(%arg0: i32, %arg1: i32, %arg2: i32) -> (i32, i32, i32) {
    %c1_i32 = arith.constant 1 : i32
    %0 = arith.muli %arg0, %c1_i32 : i32
    %1 = arith.addi %0, %arg2 : i32
    %c0_i32 = arith.constant 0 : i32
    %2 = arith.minsi %1, %c0_i32 : i32
    %c0_i32_0 = arith.constant 0 : i32
    %c0_i32_1 = arith.constant 0 : i32
    return %arg1, %c0_i32_0, %2 : i32, i32, i32
  }
  func.func @transform_1(%arg0: i32, %arg1: i32, %arg2: i32) -> (i32, i32, i32) {
    %c1_i32 = arith.constant 1 : i32
    %0 = arith.muli %arg0, %c1_i32 : i32
    %1 = arith.addi %0, %arg2 : i32
    %c0_i32 = arith.constant 0 : i32
    %2 = arith.minsi %1, %c0_i32 : i32
    %c0_i32_0 = arith.constant 0 : i32
    %c0_i32_1 = arith.constant 0 : i32
    return %arg1, %c0_i32_0, %2 : i32, i32, i32
  }
  func.func @transform_2(%arg0: i32, %arg1: i32, %arg2: i32) -> (i32, i32, i32) {
    %c0_i32 = arith.constant 0 : i32
    %c0_i32_0 = arith.constant 0 : i32
    %c0_i32_1 = arith.constant 0 : i32
    return %arg0, %c0_i32, %c0_i32_0 : i32, i32, i32
  }
  func.func @transform_3(%arg0: i32, %arg1: i32, %arg2: i32) -> (i32, i32, i32) {
    %c0_i32 = arith.constant 0 : i32
    %c0_i32_0 = arith.constant 0 : i32
    %c0_i32_1 = arith.constant 0 : i32
    return %arg0, %c0_i32, %c0_i32_0 : i32, i32, i32
  }
  func.func @transform_4(%arg0: i32, %arg1: i32, %arg2: i32) -> (i32, i32, i32) {
    %c0_i32 = arith.constant 0 : i32
    %c0_i32_0 = arith.constant 0 : i32
    %c0_i32_1 = arith.constant 0 : i32
    return %arg0, %c0_i32, %c0_i32_0 : i32, i32, i32
  }
  func.func @transform_5(%arg0: i32, %arg1: i32, %arg2: i32) -> (i32, i32, i32) {
    %c0_i32 = arith.constant 0 : i32
    %c0_i32_0 = arith.constant 0 : i32
    %c0_i32_1 = arith.constant 0 : i32
    return %arg0, %c0_i32, %c0_i32_0 : i32, i32, i32
  }
}

</mosaic_0001>

<llo_original>
// kernel: tpu_custom_call.1
$region0: #{tpu_custom_call.1}
  #allocation0 [shape = 'u32[]', space=smem, size = 0x4, offset = 0x4, fixed_abs, tag = 'smem constant byte address 0x4 - core index']
  #allocation1 [shape = 'u32[72,128]{1,0:T(1,128)}', space=vmem, size = 0x9000, scoped, tag = 'internal scratch']
  %s0 = inlined_call_operand.hbm [shape: f32[2,4,256], index: 0, kind: input, shape index: {}]
  %s1 = inlined_call_operand.hbm [shape: s32[2,1,256], index: 1, kind: input, shape index: {}]
  %s2 = inlined_call_operand.vmem [shape: f32[1,4,1], index: 2, kind: output, shape index: {0}]
  %s3 = inlined_call_operand.vmem [shape: f32[1,4,1], index: 3, kind: output, shape index: {1}]
  %s4 = inlined_call_operand.vmem [shape: f32[1,4,1], index: 4, kind: output, shape index: {2}]
  %s5 = inlined_call_operand.hbm [shape: f32[1,1,1], index: 5, kind: output, shape index: {3}]
  %6 = xla_tuple %s2, %s3, %s4, %s5
  %s7 = sld [smem:[#allocation0]]
  $region77: #{tpu_custom_call.1} parent=0
    _
  %s9 = ssub.s32 1, %s7
  %s10 = scalar_select 0, %s9, %s7
  $region1: #{tpu_custom_call.1} parent=0
    #allocation2 [shape = 'u8[8192]{0}', space=vmem, size = 0x2000, scoped, tag = 'input window, operand 0']
    #allocation3 [shape = 's32[2]{0}', space=sflag, size = 0x8, scoped, tag = 'scoped memory for tpu_custom_call.1']
    #allocation4 [shape = 's32[2]{0}', space=sflag, size = 0x8, scoped, tag = 'scoped memory for tpu_custom_call.1']
    #allocation5 [shape = 'u8[2048]{0}', space=vmem, size = 0x800, scoped, tag = 'input window, operand 1']
    #allocation6 [shape = 's32[2]{0}', space=sflag, size = 0x8, scoped, tag = 'scoped memory for tpu_custom_call.1']
    #allocation7 [shape = 'u8[512]{0}', space=vmem, size = 0x400, scoped, tag = 'output window, operand 3, single buffered']
    %11 = vsyncpa [#allocation3], 0
    %s12 = scalar_lea.sflag [#allocation3], 1
    %13 = vsyncpa %s12, 0
    %14 = vsyncpa [#allocation6], 0
    %s15 = scalar_lea.sflag [#allocation6], 1
    %16 = vsyncpa %s15, 0
    %17 = vsyncpa [#allocation4], 0
    loop: start=0, step=1, limit=4
    $region2: #{tpu_custom_call.1} parent=1 // loop_pre_header
      _
    $region3: #{tpu_custom_call.1} parent=1 // loop_header
      %s19 = sphi 0, %s23
      %p20 = scmp.ge.s32.totalorder %s19, 4
      %s26 = sphi 0, %s45
      %s27 = sphi 0, %s41
      %s28 = sphi 0, %s37
      %s29 = sphi 0, %s26
      %s30 = sphi 0, %s27
      %s31 = sphi 0, %s28
      %s32 = sphi 0, %s29
      %s33 = sphi 0, %s30
      %s34 = sphi 0, %s31
      %s56 = sphi 0, %s58
      %s59 = sphi 0, %s56
      %s60 = sphi 0, %s59
      %s76 = sphi 0, %s60
      %s90 = sphi 0, %s92
      %s93 = sphi 0, %s90
      %s94 = sphi 0, %s93
      %s110 = sphi 0, %s94
      %s116 = sphi 0, %s118
      %s119 = sphi 0, %s116
      %s120 = sphi 0, %s119
      %s136 = sphi 0, %s120
      %s142 = sphi 0, %s144
      %s145 = sphi 0, %s142
      %s146 = sphi 0, %s145
      %s162 = sphi 0, %s146
      %s168 = sphi 0, %s170
      %s171 = sphi 0, %s168
      %s172 = sphi 0, %s171
      %s188 = sphi 0, %s172
      %s194 = sphi 0, %s196
      %s197 = sphi 0, %s194
      %s198 = sphi 0, %s197
      %s214 = sphi 0, %s198
    $region4: #{tpu_custom_call.1} parent=1 // loop_header_branch
      %22 = sbr.rel (%p20) target = $region8
    $region5: #{tpu_custom_call.1} parent=1 // loop_body
      %s24 = ssub.s32 %s19, 1
      %s25 = ssub.s32 %s19, 2
      %s35 = sadd.s32 1, %s28
      %p36 = scmp.ge.s32.totalorder %s35, 1
      %s37 = scalar_select %p36, 0, %s35
      %s38 = sadd.s32 1, %s27
      %s39 = scalar_select %p36, %s38, %s27
      %p40 = scmp.ge.s32.totalorder %s39, 2
      %s41 = scalar_select %p40, 0, %s39
      %s42 = sadd.s32 1, %s26
      %s43 = scalar_select %p40, %s42, %s26
      %p44 = scmp.ge.s32.totalorder %s43, 1
      %s45 = scalar_select %p44, 0, %s43
      %s46 = sadd.s32 %s26, %s28
      %p47 = scmp.lt.s32.totalorder %s46, 0
      %s48 = scalar_select %p47, %s46, 0
      %s49 = sadd.s32 %s45, %s37
      %p50 = scmp.lt.s32.totalorder %s49, 0
      %s51 = scalar_select %p50, %s49, 0
      %s52 = ssub.s32 %s27, %s41
      %s53 = ssub.s32 %s48, %s51
      %s54 = sor.u32 %s52, %s53
      %p55 = scmp.eq.s32.totalorder %s54, 0
      %s57 = sadd.s32 %s56, 1
      %s58 = scalar_select %p55, %s56, %s57
      %p61 = pneg %p55
      %p62 = scmp.eq.s32.totalorder %s19, 1
      %p63 = por %p61, %p62
      %p64 = scmp.ne.s32.totalorder %s56, %s59
      %p65 = scmp.eq.s32.totalorder %s19, 0
      %p66 = por %p64, %p65
      %p67 = scmp.ne.s32.totalorder %s56, %s59
      %p68 = scmp.eq.s32.totalorder %s24, 1
      %p69 = por %p67, %p68
      %p70 = scmp.ne.s32.totalorder %s59, %s60
      %p71 = scmp.eq.s32.totalorder %s24, 0
      %p72 = por %p70, %p71
      %p73 = scmp.ne.s32.totalorder %s59, %s60
      %p74 = scmp.eq.s32.totalorder %s25, 1
      %p75 = por %p73, %p74
      %p77 = scmp.ne.s32.totalorder %s60, %s76
      %p78 = scmp.eq.s32.totalorder %s25, 0
      %p79 = por %p77, %p78
      %s80 = sadd.s32 %s26, %s28
      %p81 = scmp.lt.s32.totalorder %s80, 0
      %s82 = scalar_select %p81, %s80, 0
      %s83 = sadd.s32 %s45, %s37
      %p84 = scmp.lt.s32.totalorder %s83, 0
      %s85 = scalar_select %p84, %s83, 0
      %s86 = ssub.s32 %s27, %s41
      %s87 = ssub.s32 %s82, %s85
      %s88 = sor.u32 %s86, %s87
      %p89 = scmp.eq.s32.totalorder %s88, 0
      %s91 = sadd.s32 %s90, 1
      %s92 = scalar_select %p89, %s90, %s91
      %p95 = pneg %p89
      %p96 = scmp.eq.s32.totalorder %s19, 1
      %p97 = por %p95, %p96
      %p98 = scmp.ne.s32.totalorder %s90, %s93
      %p99 = scmp.eq.s32.totalorder %s19, 0
      %p100 = por %p98, %p99
      %p101 = scmp.ne.s32.totalorder %s90, %s93
      %p102 = scmp.eq.s32.totalorder %s24, 1
      %p103 = por %p101, %p102
      %p104 = scmp.ne.s32.totalorder %s93, %s94
      %p105 = scmp.eq.s32.totalorder %s24, 0
      %p106 = por %p104, %p105
      %p107 = scmp.ne.s32.totalorder %s93, %s94
      %p108 = scmp.eq.s32.totalorder %s25, 1
      %p109 = por %p107, %p108
      %p111 = scmp.ne.s32.totalorder %s94, %s110
      %p112 = scmp.eq.s32.totalorder %s25, 0
      %p113 = por %p111, %p112
      %s114 = ssub.s32 %s26, %s45
      %p115 = scmp.eq.s32.totalorder %s114, 0
      %s117 = sadd.s32 %s116, 1
      %s118 = scalar_select %p115, %s116, %s117
      %p121 = pneg %p115
      %p122 = scmp.eq.s32.totalorder %s19, 1
      %p123 = por %p121, %p122
      %p124 = scmp.ne.s32.totalorder %s116, %s119
      %p125 = scmp.eq.s32.totalorder %s19, 0
      %p126 = por %p124, %p125
      %p127 = scmp.ne.s32.totalorder %s116, %s119
      %p128 = scmp.eq.s32.totalorder %s24, 1
      %p129 = por %p127, %p128
      %p130 = scmp.ne.s32.totalorder %s119, %s120
      %p131 = scmp.eq.s32.totalorder %s24, 0
      %p132 = por %p130, %p131
      %p133 = scmp.ne.s32.totalorder %s119, %s120
      %p134 = scmp.eq.s32.totalorder %s25, 1
      %p135 = por %p133, %p134
      %p137 = scmp.ne.s32.totalorder %s120, %s136
      %p138 = scmp.eq.s32.totalorder %s25, 0
      %p139 = por %p137, %p138
      %s140 = ssub.s32 %s26, %s45
      %p141 = scmp.eq.s32.totalorder %s140, 0
      %s143 = sadd.s32 %s142, 1
      %s144 = scalar_select %p141, %s142, %s143
      %p147 = pneg %p141
      %p148 = scmp.eq.s32.totalorder %s19, 1
      %p149 = por %p147, %p148
      %p150 = scmp.ne.s32.totalorder %s142, %s145
      %p151 = scmp.eq.s32.totalorder %s19, 0
      %p152 = por %p150, %p151
      %p153 = scmp.ne.s32.totalorder %s142, %s145
      %p154 = scmp.eq.s32.totalorder %s24, 1
      %p155 = por %p153, %p154
      %p156 = scmp.ne.s32.totalorder %s145, %s146
      %p157 = scmp.eq.s32.totalorder %s24, 0
      %p158 = por %p156, %p157
      %p159 = scmp.ne.s32.totalorder %s145, %s146
      %p160 = scmp.eq.s32.totalorder %s25, 1
      %p161 = por %p159, %p160
      %p163 = scmp.ne.s32.totalorder %s146, %s162
      %p164 = scmp.eq.s32.totalorder %s25, 0
      %p165 = por %p163, %p164
      %s166 = ssub.s32 %s26, %s45
      %p167 = scmp.eq.s32.totalorder %s166, 0
      %s169 = sadd.s32 %s168, 1
      %s170 = scalar_select %p167, %s168, %s169
      %p173 = pneg %p167
      %p174 = scmp.eq.s32.totalorder %s19, 1
      %p175 = por %p173, %p174
      %p176 = scmp.ne.s32.totalorder %s168, %s171
      %p177 = scmp.eq.s32.totalorder %s19, 0
      %p178 = por %p176, %p177
      %p179 = scmp.ne.s32.totalorder %s168, %s171
      %p180 = scmp.eq.s32.totalorder %s24, 1
      %p181 = por %p179, %p180
      %p182 = scmp.ne.s32.totalorder %s171, %s172
      %p183 = scmp.eq.s32.totalorder %s24, 0
      %p184 = por %p182, %p183
      %p185 = scmp.ne.s32.totalorder %s171, %s172
      %p186 = scmp.eq.s32.totalorder %s25, 1
      %p187 = por %p185, %p186
      %p189 = scmp.ne.s32.totalorder %s172, %s188
      %p190 = scmp.eq.s32.totalorder %s25, 0
      %p191 = por %p189, %p190
      %s192 = ssub.s32 %s26, %s45
      %p193 = scmp.eq.s32.totalorder %s192, 0
      %s195 = sadd.s32 %s194, 1
      %s196 = scalar_select %p193, %s194, %s195
      %p199 = pneg %p193
      %p200 = scmp.eq.s32.totalorder %s19, 1
      %p201 = por %p199, %p200
      %p202 = scmp.ne.s32.totalorder %s194, %s197
      %p203 = scmp.eq.s32.totalorder %s19, 0
      %p204 = por %p202, %p203
      %p205 = scmp.ne.s32.totalorder %s194, %s197
      %p206 = scmp.eq.s32.totalorder %s24, 1
      %p207 = por %p205, %p206
      %p208 = scmp.ne.s32.totalorder %s197, %s198
      %p209 = scmp.eq.s32.totalorder %s24, 0
      %p210 = por %p208, %p209
      %p211 = scmp.ne.s32.totalorder %s197, %s198
      %p212 = scmp.eq.s32.totalorder %s25, 1
      %p213 = por %p211, %p212
      %p215 = scmp.ne.s32.totalorder %s198, %s214
      %p216 = scmp.eq.s32.totalorder %s25, 0
      %p217 = por %p215, %p216
      %p218 = scmp.le.s32.totalorder 1, %s19
      %p219 = scmp.lt.s32.totalorder %s19, 3
      %p220 = pnand %p218, %p219
      %p221 = pneg %p220
      // Predicated region
      $region9: #{tpu_custom_call.1} parent=5 // pred_check
        _
      $region10: #{tpu_custom_call.1} parent=5 // pred_check_branch
        %223 = sbr.rel (%p220) target = $region12
      $region11: #{tpu_custom_call.1} parent=5 // pred_region
        %s224 = ssub.s32 %s19, 1
      $region12: #{tpu_custom_call.1} parent=5 // pred_fallthru
        _
      %p225 = scmp.lt.s32.totalorder %s19, 2
      // Predicated region
      $region13: #{tpu_custom_call.1} parent=5 // pred_check
        %p226 = pneg %p225
      $region14: #{tpu_custom_call.1} parent=5 // pred_check_branch
        %228 = sbr.rel (%p226) target = $region16
      $region15: #{tpu_custom_call.1} parent=5 // pred_region
        // Predicated region
        $region17: #{tpu_custom_call.1} parent=15 // pred_check
          %p229 = pneg %p66
        $region18: #{tpu_custom_call.1} parent=15 // pred_check_branch
          %231 = sbr.rel (%p229) target = $region20
        $region19: #{tpu_custom_call.1} parent=15 // pred_region
          %s232 = sand.u32 %s56, 1
          %s233 = scalar_lea.sflag [#allocation3], %s232
          %s234 = sand.u32 %s56, 1
          %s235 = smul.addr %s234, 8
          %s236 = scalar_lea.vmem [#allocation2], %s235
          %s237 = sadd.s32 %s26, %s28
          %p238 = scmp.lt.s32.totalorder %s237, 0
          %s239 = scalar_select %p238, %s237, 0
          %s240 = smul.u32 2, %s239
          %242 = vsyncadd %s233, 0
          %s243 = smul.addr %s27, 2
          %s244 = sadd.s32 %s240, %s243
          %s245 = smul.addr %s244, 4
          %s246 = scalar_lea.hbm %s0, %s245
          %s248 = sshll.u32 %s246, 4
          %s249 = int_to_ptr.hbm [resolvable:$true] %s248
          %s250 = sshll.u32 %s236, 4
          %s251 = int_to_ptr.vmem [resolvable:$true] %s250
          %253 = dma.hbm_to_vmem [thread:$0]  %s249, 128, %s251, %s233
        $region20: #{tpu_custom_call.1} parent=15 // pred_fallthru
          _
        // Predicated region
        $region21: #{tpu_custom_call.1} parent=15 // pred_check
          %p254 = pneg %p100
        $region22: #{tpu_custom_call.1} parent=15 // pred_check_branch
          %256 = sbr.rel (%p254) target = $region24
        $region23: #{tpu_custom_call.1} parent=15 // pred_region
          %s257 = sand.u32 %s90, 1
          %s258 = scalar_lea.sflag [#allocation6], %s257
          %s259 = sand.u32 %s90, 1
          %s260 = smul.addr %s259, 2
          %s261 = scalar_lea.vmem [#allocation5], %s260
          %s262 = sadd.s32 %s26, %s28
          %p263 = scmp.lt.s32.totalorder %s262, 0
          %s264 = scalar_select %p263, %s262, 0
          %s265 = smul.u32 2, %s264
          %267 = vsyncadd %s258, 0
          %s268 = smul.addr %s27, 2
          %s269 = sadd.s32 %s265, %s268
          %s270 = scalar_lea.hbm %s1, %s269
          %s272 = sshll.u32 %s270, 4
          %s273 = int_to_ptr.hbm [resolvable:$true] %s272
          %s274 = sshll.u32 %s261, 4
          %s275 = int_to_ptr.vmem [resolvable:$true] %s274
          %277 = dma.hbm_to_vmem [thread:$0]  %s273, 32, %s275, %s258
        $region24: #{tpu_custom_call.1} parent=15 // pred_fallthru
          _
      $region16: #{tpu_custom_call.1} parent=5 // pred_fallthru
        _
      %p278 = scmp.le.s32.totalorder 1, %s19
      %p279 = scmp.lt.s32.totalorder %s19, 3
      %p280 = pnand %p278, %p279
      %p281 = pneg %p280
      // Predicated region
      $region25: #{tpu_custom_call.1} parent=5 // pred_check
        _
      $region26: #{tpu_custom_call.1} parent=5 // pred_check_branch
        %283 = sbr.rel (%p280) target = $region28
      $region27: #{tpu_custom_call.1} parent=5 // pred_region
        %s284 = ssub.s32 %s19, 1
        %s285 = sand.u32 %s59, 1
        %s286 = scalar_lea.sflag [#allocation3], %s285
        %s287 = sand.u32 %s59, 1
        %s288 = smul.addr %s287, 8
        %s289 = scalar_lea.vmem [#allocation2], %s288
        // Predicated region
        $region29: #{tpu_custom_call.1} parent=27 // pred_check
          %p290 = pneg %p72
        $region30: #{tpu_custom_call.1} parent=27 // pred_check_branch
          %292 = sbr.rel (%p290) target = $region32
        $region31: #{tpu_custom_call.1} parent=27 // pred_region
          %294 = dma.done %s286, 128
        $region32: #{tpu_custom_call.1} parent=27 // pred_fallthru
          _
        %s295 = sand.u32 %s93, 1
        %s296 = scalar_lea.sflag [#allocation6], %s295
        %s297 = sand.u32 %s93, 1
        %s298 = smul.addr %s297, 2
        %s299 = scalar_lea.vmem [#allocation5], %s298
        // Predicated region
        $region33: #{tpu_custom_call.1} parent=27 // pred_check
          %p300 = pneg %p106
        $region34: #{tpu_custom_call.1} parent=27 // pred_check_branch
          %302 = sbr.rel (%p300) target = $region36
        $region35: #{tpu_custom_call.1} parent=27 // pred_region
          %304 = dma.done %s296, 32
        $region36: #{tpu_custom_call.1} parent=27 // pred_fallthru
          _
        %s305 = sand.u32 %s59, 1
        %s306 = scalar_lea.sflag [#allocation3], %s305
        %s307 = sand.u32 %s59, 1
        %s308 = smul.addr %s307, 8
        %s309 = scalar_lea.vmem [#allocation2], %s308
        %p310 = pneg %p72
        %p311 = pneg %p69
        %s312 = sand.u32 %s93, 1
        %s313 = scalar_lea.sflag [#allocation6], %s312
        %s314 = sand.u32 %s93, 1
        %s315 = smul.addr %s314, 2
        %s316 = scalar_lea.vmem [#allocation5], %s315
        %p317 = pneg %p106
        %p318 = pneg %p103
        %p319 = pneg %p132
        %p320 = pneg %p129
        %p321 = scmp.lt.s32.totalorder %s29, 0
        %s322 = scalar_select %p321, %s29, 0
        %s323 = smul.addr %s322, 4
        %s324 = scalar_lea.vmem %s2, %s323
        %p325 = pneg %p158
        %p326 = pneg %p155
        %p327 = scmp.lt.s32.totalorder %s29, 0
        %s328 = scalar_select %p327, %s29, 0
        %s329 = smul.addr %s328, 4
        %s330 = scalar_lea.vmem %s3, %s329
        %p331 = pneg %p184
        %p332 = pneg %p181
        %p333 = scmp.lt.s32.totalorder %s29, 0
        %s334 = scalar_select %p333, %s29, 0
        %s335 = smul.addr %s334, 4
        %s336 = scalar_lea.vmem %s4, %s335
        %p337 = pneg %p210
        %p338 = pneg %p207
        %s339 = sadd.s32 %s29, %s31
        %p340 = scmp.lt.s32.totalorder %s339, 0
        %s341 = scalar_select %p340, %s339, 0
        %s342 = smul.u32 2, %s341
        %s343 = sadd.s32 %s29, %s31
        %p344 = scmp.lt.s32.totalorder %s343, 0
        %s345 = scalar_select %p344, %s343, 0
        %s346 = smul.u32 2, %s345
        %p347 = scmp.lt.s32.totalorder %s29, 0
        %s348 = scalar_select %p347, %s29, 0
        %s349 = smul.addr %s348, 4
        %s350 = scalar_lea.vmem %s2, %s349
        %p351 = scmp.lt.s32.totalorder %s29, 0
        %s352 = scalar_select %p351, %s29, 0
        %s353 = smul.addr %s352, 4
        %s354 = scalar_lea.vmem %s3, %s353
        %p355 = scmp.lt.s32.totalorder %s29, 0
        %s356 = scalar_select %p355, %s29, 0
        %s357 = smul.addr %s356, 4
        %s358 = scalar_lea.vmem %s4, %s357
        %p359 = scmp.eq.s32.totalorder %s30, 0
        %p360 = scmp.eq.s32.totalorder %s31, 0
        %p361 = pnand %p359, %p360
        %p362 = pneg %p361
        // Predicated region
        $region37: #{tpu_custom_call.1} parent=27 // pred_check
          _
        $region38: #{tpu_custom_call.1} parent=27 // pred_check_branch
          %364 = sbr.rel (%p361) target = $region40
        $region39: #{tpu_custom_call.1} parent=27 // pred_region
          %vm365 = vcmask 3072
          %366 = vst.msk [vmem:[%s350] sm:$0xf] %vm365, 0.0
          %367 = vst.msk [vmem:[%s354] sm:$0xf] %vm365, 0.0
          %368 = vst.msk [vmem:[%s358] sm:$0xf] %vm365, 0.0
          %vm369 = vcmask 0
          %370 = vst.msk [vmem:[#allocation7] sm:$0x1] %vm369, 0.0
        $region40: #{tpu_custom_call.1} parent=27 // pred_fallthru
          _
        %v371 = vld [vmem:[%s289] sm:$0xff]
        %v372 = vld [vmem:[%s299] sm:$0x3]
        %s373 = sadd.s32 %s29, %s31
        %v374 = vlaneseq
        %v375 = vand.u32 %v374, 127
        %v376 = vadd.s32 %v375, 128
        %s377 = smul.u32 %s373, 256
        %v378 = vstv %s377
        %v379 = vadd.s32 %v378, %v375
        %v380 = vadd.s32 %v378, %v376
        %vm381 = vcmp.lt.s32.totalorder %v379, 256
        %vm382 = vcmp.lt.s32.totalorder %v380, 256
        %v383 = vlaneseq
        %v384 = vshrl.u32 %v383, 7
        %v385 = vperm.slane %v372, 0
        %v386 = vperm.slane %v372, 1
        %vm387 = vcmp.eq.s32.totalorder %v384, %v385
        %vm388 = vcmp.eq.s32.totalorder %v384, %v386
        %v389 = vsel %vm387, 1, 0
        %v390 = vsel %vm388, 1, 0
        %v391 = vcvt.s32.f32 %v389
        %v392 = vcvt.s32.f32 %v390
        %v393 = vsel %vm381, 1, 0
        %v394 = vsel %vm382, 1, 0
        %vm395 = vcmp.eq.s32.totalorder %v393, 1
        %vm396 = vcmp.eq.s32.totalorder %v394, 1
        %v397 = vsel %vm395, %v391, 0.0
        %v398 = vsel %vm396, %v392, 0.0
        %v399 = vmax.f32 %v371, 0.0
        %v402 = vrot.slane %v398, 4
        %vm403 = vcmask 1043456
        %v404 = vsel %vm403, %v397, %v402
        %v406 = vmul.f32 %v371, %v404
        %v407 = vsub.f32 %v399, %v406
        %v408 = vand.u32 2147483647, %v371
        %v409 = vsub.f32 0.0, %v408
        %v410 = vmul.f32 %v409, 1.442695
        %v411 = vpow.pop %v410
        %v412 = vadd.f32 %v411, 1.0
        %v413 = vlog2.pop %v412
        %v414 = vmul.f32 %v413, 0.6931472
        %v415 = vmul.f32 -0.5, %v411
        %v416 = vadd.f32 %v415, 1.0
        %v417 = vmul.f32 %v416, %v411
        %v418 = vand.u32 2147483647, %v411
        %vm419 = vcmp.lt.f32.partialorder %v418, 0.0004427343
        %v420 = vsel %vm419, %v417, %v414
        %v421 = vadd.f32 %v407, %v420
        %v422 = vld [vmem:[#allocation7] sm:$0x1]
        %424 = vst [vmem:[#allocation1] ss:$2 sm:$0xff] %v421
        %v425 = vld.sshfl [vmem:[#allocation1] sm:$0xff pattern:$0x75316420]
        %v426 = vld.sshfl [vmem:[#allocation1 + $0x8] sm:$0xff pattern:$0x75316420]
        %v429 = vsel %vm395, %v425, 0.0
        %v430 = vsel %vm396, %v426, 0.0
        %v431 = vsel %vm403, %v429, 0.0
        %v432 = vsel %vm403, %v430, 0.0
        %v433 = vadd.f32 %v431, %v432
        %434 = vadd.xlane.f32.xlu0 %v433
        %v435 = vpop.xlane.xlu0 %434
        %v436 = vrot.slane %v435, 4
        %v437 = vadd.f32 %v435, %v436
        %v438 = vrot.slane %v437, 2
        %v439 = vadd.f32 %v437, %v438
        %v440 = vrot.slane %v439, 1
        %v441 = vadd.f32 %v439, %v440
        %s442 = vtos %v441
        %v443 = vstv %s442
        %v444 = vadd.f32 %v422, %v443
        %vm445 = vcmask 0
        %446 = vst.msk [vmem:[#allocation7] sm:$0x1] %vm445, %v444
        %448 = vst [vmem:[#allocation1] ss:$2 sm:$0xff] %v371
        %v449 = vld.sshfl [vmem:[#allocation1] sm:$0xff pattern:$0x75316420]
        %v450 = vld.sshfl [vmem:[#allocation1 + $0x8] sm:$0xff pattern:$0x75316420]
        %v453 = vsel %vm403, %v449, -inf
        %v454 = vrot.slane %v453, 4
        %v455 = vmax.f32 %v453, %v454
        %v456 = vrot.slane %v455, 2
        %v457 = vmax.f32 %v455, %v456
        %v458 = vrot.slane %v457, 1
        %v459 = vmax.f32 %v457, %v458
        %v460 = vsel %vm403, %v450, -inf
        %v461 = vrot.slane %v460, 4
        %v462 = vmax.f32 %v460, %v461
        %v463 = vrot.slane %v462, 2
        %v464 = vmax.f32 %v462, %v463
        %v465 = vrot.slane %v464, 1
        %v466 = vmax.f32 %v464, %v465
        %v469 = vrot.slane %v466, 4
        %v470 = vsel %vm403, %v459, %v469
        %v472 = vsub.f32 %v371, %v470
        %v473 = vmul.f32 %v472, 1.442695
        %v474 = vpow.pop %v473
        %476 = vst [vmem:[#allocation1] ss:$2 sm:$0xff] %v474
        %v477 = vld.sshfl [vmem:[#allocation1] sm:$0xff pattern:$0x75316420]
        %v478 = vld.sshfl [vmem:[#allocation1 + $0x8] sm:$0xff pattern:$0x75316420]
        %v481 = vsel %vm403, %v477, 0.0
        %v482 = vrot.slane %v481, 4
        %v483 = vadd.f32 %v481, %v482
        %v484 = vrot.slane %v483, 2
        %v485 = vadd.f32 %v483, %v484
        %v486 = vrot.slane %v485, 1
        %v487 = vadd.f32 %v485, %v486
        %v488 = vsel %vm403, %v478, 0.0
        %v489 = vrot.slane %v488, 4
        %v490 = vadd.f32 %v488, %v489
        %v491 = vrot.slane %v490, 2
        %v492 = vadd.f32 %v490, %v491
        %v493 = vrot.slane %v492, 1
        %v494 = vadd.f32 %v492, %v493
        %v495 = vrcp.pop %v487
        %v496 = vrcp.pop %v494
        %v499 = vrot.slane %v496, 4
        %v500 = vsel %vm403, %v495, %v499
        %v502 = vmul.f32 %v474, %v500
        %v503 = vld [vmem:[%s350] sm:$0xf]
        %v504 = vmul.f32 %v502, %v404
        %506 = vst [vmem:[#allocation1] ss:$2 sm:$0xff] %v504
        %v507 = vld.sshfl [vmem:[#allocation1] sm:$0xff pattern:$0x75316420]
        %v508 = vld.sshfl [vmem:[#allocation1 + $0x8] sm:$0xff pattern:$0x75316420]
        %v511 = vsel %vm395, %v507, 0.0
        %v512 = vsel %vm396, %v508, 0.0
        %v513 = vsel %vm403, %v511, 0.0
        %v514 = vsel %vm403, %v512, 0.0
        %v515 = vadd.f32 %v513, %v514
        %516 = vadd.xlane.f32.xlu0 %v515
        %v517 = vpop.xlane.xlu0 %516
        %v518 = vadd.f32 %v503, %v517
        %vm519 = vcmask 3072
        %520 = vst.msk [vmem:[%s350] sm:$0xf] %vm519, %v518
        %v521 = vld [vmem:[%s354] sm:$0xf]
        %v522 = vmul.f32 %v502, %v502
        %524 = vst [vmem:[#allocation1] ss:$2 sm:$0xff] %v522
        %v525 = vld.sshfl [vmem:[#allocation1] sm:$0xff pattern:$0x75316420]
        %v526 = vld.sshfl [vmem:[#allocation1 + $0x8] sm:$0xff pattern:$0x75316420]
        %v529 = vsel %vm395, %v525, 0.0
        %v530 = vsel %vm396, %v526, 0.0
        %v531 = vsel %vm403, %v529, 0.0
        %v532 = vsel %vm403, %v530, 0.0
        %v533 = vadd.f32 %v531, %v532
        %534 = vadd.xlane.f32.xlu0 %v533
        %v535 = vpop.xlane.xlu0 %534
        %v536 = vadd.f32 %v521, %v535
        %537 = vst.msk [vmem:[%s354] sm:$0xf] %vm519, %v536
        %v538 = vld [vmem:[%s358] sm:$0xf]
        %v539 = vsel %vm403, %v397, 0.0
        %v540 = vsel %vm403, %v398, 0.0
        %v541 = vadd.f32 %v539, %v540
        %542 = vadd.xlane.f32.xlu0 %v541
        %v543 = vpop.xlane.xlu0 %542
        %v544 = vadd.f32 %v538, %v543
        %545 = vst.msk [vmem:[%s358] sm:$0xf] %vm519, %v544
        %p546 = scmp.lt.s32.totalorder %s29, 0
        %s547 = scalar_select %p546, %s29, 0
        %s548 = smul.addr %s547, 4
        %s549 = scalar_lea.vmem %s2, %s548
        %p550 = scmp.lt.s32.totalorder %s29, 0
        %s551 = scalar_select %p550, %s29, 0
        %s552 = smul.addr %s551, 4
        %s553 = scalar_lea.vmem %s3, %s552
        %p554 = scmp.lt.s32.totalorder %s29, 0
        %s555 = scalar_select %p554, %s29, 0
        %s556 = smul.addr %s555, 4
        %s557 = scalar_lea.vmem %s4, %s556
        // Predicated region
        $region41: #{tpu_custom_call.1} parent=27 // pred_check
          %p558 = pneg %p129
        $region42: #{tpu_custom_call.1} parent=27 // pred_check_branch
          %560 = sbr.rel (%p558) target = $region44
        $region43: #{tpu_custom_call.1} parent=27 // pred_region
          _
        $region44: #{tpu_custom_call.1} parent=27 // pred_fallthru
          _
        // Predicated region
        $region45: #{tpu_custom_call.1} parent=27 // pred_check
          %p561 = pneg %p155
        $region46: #{tpu_custom_call.1} parent=27 // pred_check_branch
          %563 = sbr.rel (%p561) target = $region48
        $region47: #{tpu_custom_call.1} parent=27 // pred_region
          _
        $region48: #{tpu_custom_call.1} parent=27 // pred_fallthru
          _
        // Predicated region
        $region49: #{tpu_custom_call.1} parent=27 // pred_check
          %p564 = pneg %p181
        $region50: #{tpu_custom_call.1} parent=27 // pred_check_branch
          %566 = sbr.rel (%p564) target = $region52
        $region51: #{tpu_custom_call.1} parent=27 // pred_region
          _
        $region52: #{tpu_custom_call.1} parent=27 // pred_fallthru
          _
        // Predicated region
        $region53: #{tpu_custom_call.1} parent=27 // pred_check
          %p567 = pneg %p207
        $region54: #{tpu_custom_call.1} parent=27 // pred_check_branch
          %569 = sbr.rel (%p567) target = $region56
        $region55: #{tpu_custom_call.1} parent=27 // pred_region
          %571 = vsyncadd [#allocation4], 0
          %s572 = scalar_lea.hbm %s5, %s29
          %s574 = sshll.u32 [#allocation7], 4
          %s575 = int_to_ptr.vmem [resolvable:$true] %s574
          %s576 = sshll.u32 %s572, 4
          %s577 = int_to_ptr.hbm [resolvable:$true] %s576
          %579 = dma.vmem_to_hbm [thread:$0]  %s575, 16, %s577, [#allocation4]
        $region56: #{tpu_custom_call.1} parent=27 // pred_fallthru
          _
        // Predicated region
        $region57: #{tpu_custom_call.1} parent=27 // pred_check
          %p580 = pneg %p129
        $region58: #{tpu_custom_call.1} parent=27 // pred_check_branch
          %582 = sbr.rel (%p580) target = $region60
        $region59: #{tpu_custom_call.1} parent=27 // pred_region
          %p583 = scmp.lt.s32.totalorder %s29, 0
          %s584 = scalar_select %p583, %s29, 0
          %s585 = smul.addr %s584, 4
          %s586 = scalar_lea.vmem %s2, %s585
        $region60: #{tpu_custom_call.1} parent=27 // pred_fallthru
          _
        // Predicated region
        $region61: #{tpu_custom_call.1} parent=27 // pred_check
          %p587 = pneg %p155
        $region62: #{tpu_custom_call.1} parent=27 // pred_check_branch
          %589 = sbr.rel (%p587) target = $region64
        $region63: #{tpu_custom_call.1} parent=27 // pred_region
          %p590 = scmp.lt.s32.totalorder %s29, 0
          %s591 = scalar_select %p590, %s29, 0
          %s592 = smul.addr %s591, 4
          %s593 = scalar_lea.vmem %s3, %s592
        $region64: #{tpu_custom_call.1} parent=27 // pred_fallthru
          _
        // Predicated region
        $region65: #{tpu_custom_call.1} parent=27 // pred_check
          %p594 = pneg %p181
        $region66: #{tpu_custom_call.1} parent=27 // pred_check_branch
          %596 = sbr.rel (%p594) target = $region68
        $region67: #{tpu_custom_call.1} parent=27 // pred_region
          %p597 = scmp.lt.s32.totalorder %s29, 0
          %s598 = scalar_select %p597, %s29, 0
          %s599 = smul.addr %s598, 4
          %s600 = scalar_lea.vmem %s4, %s599
        $region68: #{tpu_custom_call.1} parent=27 // pred_fallthru
          _
        // Predicated region
        $region69: #{tpu_custom_call.1} parent=27 // pred_check
          %p601 = pneg %p207
        $region70: #{tpu_custom_call.1} parent=27 // pred_check_branch
          %603 = sbr.rel (%p601) target = $region72
        $region71: #{tpu_custom_call.1} parent=27 // pred_region
          %605 = dma.done [#allocation4], 16
        $region72: #{tpu_custom_call.1} parent=27 // pred_fallthru
          _
      $region28: #{tpu_custom_call.1} parent=5 // pred_fallthru
        _
      %p606 = scmp.le.s32.totalorder 2, %s19
      // Predicated region
      $region73: #{tpu_custom_call.1} parent=5 // pred_check
        %p607 = pneg %p606
      $region74: #{tpu_custom_call.1} parent=5 // pred_check_branch
        %609 = sbr.rel (%p607) target = $region76
      $region75: #{tpu_custom_call.1} parent=5 // pred_region
        %s610 = ssub.s32 %s19, 2
      $region76: #{tpu_custom_call.1} parent=5 // pred_fallthru
        _
    $region6: #{tpu_custom_call.1} parent=1 // loop_footer
      %s23 = sadd.s32 1, %s19
    $region7: #{tpu_custom_call.1} parent=1 // loop_footer_branch
      %18 = sbr.rel target = $region3
    $region8: #{tpu_custom_call.1} parent=1 // loop_exit
      _
    %611 = vsyncpa [#allocation3], 1
    %s612 = scalar_lea.sflag [#allocation3], 1
    %613 = vsyncpa %s612, 1
    %614 = vsyncpa [#allocation6], 1
    %s615 = scalar_lea.sflag [#allocation6], 1
    %616 = vsyncpa %s615, 1
    %617 = vsyncpa [#allocation4], 1
    %s618 = scalar_lea.sflag [#allocation4], 1
    %619 = vsyncpa %s618, 1

</llo_original>
